<compile_context>
chip_gen: v6e
topology: v6e:2x2x1
jax: 0.10.0
libtpu: 0.0.40
codegen_flags: <defaults>
</compile_context>

<pallas_src>
import math
from functools import partial

import jax
import jax.numpy as jnp
from jax.experimental import pallas as pl
from jax.experimental.pallas import tpu as pltpu

LANES = 128


def _round_up(x: int, m: int) -> int:
    return ((x + m - 1) // m) * m


def _sublanes(dtype) -> int:
    # Native sublane packing: 8 rows for 4-byte dtypes, 16 for 2-byte, 32 for 1-byte.
    return max(8, 32 // jnp.dtype(dtype).itemsize)


def mlp_kernel(x_ref, w1_ref, b1_ref, w2_ref, b2_ref, o_ref, *, mxu_dtype):
    # Layer 1: x @ W1 on the MXU with f32 accumulation.
    # TODO(synk): for Hp >= ~2048, chunk the hidden dim (loop over 512-wide
    # slices of W1/W2 with an f32 VMEM accumulator) instead of materializing
    # the full TB x Hp f32 hidden - matters most under v7x's 64 MiB VMEM.
    h = jnp.dot(x_ref[...].astype(mxu_dtype), w1_ref[...],
                preferred_element_type=jnp.float32)
    # Bias-add + tanh kept in f32 (EUP transcendental; v5e has no bf16 VPU/EUP).
    h = jnp.tanh(h + b1_ref[...])
    # Layer 2: tanh(h) @ W2 on the MXU with f32 accumulation, then bias.
    o = jnp.dot(h.astype(mxu_dtype), w2_ref[...],
                preferred_element_type=jnp.float32)
    o_ref[...] = (o + b2_ref[...]).astype(o_ref.dtype)


def prepare_params(w1, b1, w2, b2, *, mxu_dtype=jnp.bfloat16):
    """Pad + cast the weights ONCE.  Cache the result; do not redo per call."""
    K, H = w1.shape
    Hw, O = w2.shape
    assert H == Hw and b1.shape == (H,) and b2.shape == (O,)
    mxu_dtype = jnp.dtype(mxu_dtype)
    Hp = _round_up(H, LANES)
    Op = _round_up(O, LANES)
    # TODO(synk): optional fp8 (float8_e4m3fn) weight cache for v7x inference
    # (halves weight VMEM residency + DMA; MXU on v7x has an fp8 path).
    w1_p = jnp.zeros((K, Hp), mxu_dtype).at[:, :H].set(w1.astype(mxu_dtype))
    w2_p = jnp.zeros((Hp, Op), mxu_dtype).at[:H, :O].set(w2.astype(mxu_dtype))
    b1_p = jnp.zeros((1, Hp), jnp.float32).at[0, :H].set(b1.astype(jnp.float32))
    b2_p = jnp.zeros((1, Op), jnp.float32).at[0, :O].set(b2.astype(jnp.float32))
    return {"w1": w1_p, "b1": b1_p, "w2": w2_p, "b2": b2_p,
            "K": K, "H": H, "O": O, "mxu_dtype": mxu_dtype}


def network_forward_prepared(x, params, *, batch_tile=512, out_dtype=None):
    """Network.forward with pre-padded / pre-cast weights (see prepare_params)."""
    B, K = x.shape
    assert K == params["K"], "x feature dim mismatch"
    w1_p, b1_p, w2_p, b2_p = params["w1"], params["b1"], params["w2"], params["b2"]
    Hp, Op, O = w1_p.shape[1], w2_p.shape[1], params["O"]
    mxu_dtype = params["mxu_dtype"]
    out_dtype = jnp.dtype(out_dtype) if out_dtype is not None else x.dtype
    isz = lambda dt: jnp.dtype(dt).itemsize

    # ---- batch-tile selection (balanced tiles; >=2 steps for v7x megacore) ----
    sub = max(_sublanes(x.dtype), _sublanes(out_dtype))
    batch_tile = max(sub, _round_up(batch_tile, sub))
    if B > batch_tile:
        n = pl.cdiv(B, batch_tile)                  # balanced: last tile not mostly pad
        TB = _round_up(pl.cdiv(B, n), sub)
    elif B >= 128:
        TB = _round_up(pl.cdiv(B, 2), sub)          # >=2 steps so both v7x TCs get work
    else:
        TB = _round_up(B, sub)

    # ---- VMEM budgeting (per-generation cap, weights budgeted at 2x) ----
    try:
        vmem_cap = pltpu.get_tpu_info().vmem_capacity_bytes
    except Exception:
        vmem_cap = 64 << 20                         # conservative (v7x per-TC)
    budget = int(vmem_cap * 0.82)                   # ~52 MiB v7x, ~105 MiB v5e/v6e

    w_bytes = (w1_p.size + w2_p.size) * isz(mxu_dtype)
    bias_bytes = (b1_p.size + b2_p.size) * 4

    def footprint(tb):
        return (2 * tb * K * isz(x.dtype)           # double-buffered x tiles
                + 2 * tb * Op * isz(out_dtype)      # double-buffered out tiles
                + 2 * (w_bytes + bias_bytes)        # resident weights/biases (2x: pipeline bufs)
                + tb * Hp * 4                       # f32 hidden intermediate
                + (1 << 20))                        # headroom

    while footprint(TB) > budget and TB > sub:
        TB = max(sub, _round_up(TB // 2, sub))
    if footprint(TB) > budget:
        # TODO(synk): tiled-weight path - add an "arbitrary" Hp/Op grid axis with
        # a VMEM accumulator instead of keeping W1/W2 fully resident.
        raise ValueError(
            f"resident weights ({w_bytes/2**20:.1f} MiB) exceed the VMEM budget "
            f"({budget/2**20:.1f} MiB); tiled-weight path not implemented")

    n_steps = pl.cdiv(B, TB)
    vmem_limit = min(budget, max(int(footprint(TB)), 16 << 20))

    # Advisory cost estimate for the XLA scheduler.
    flops = 2 * B * (K * Hp + Hp * Op)
    bytes_accessed = (B * K * isz(x.dtype) + w_bytes + bias_bytes
                      + B * Op * isz(out_dtype))

    out_p = pl.pallas_call(
        partial(mlp_kernel, mxu_dtype=mxu_dtype),
        out_shape=jax.ShapeDtypeStruct((B, Op), out_dtype),
        grid_spec=pltpu.PrefetchScalarGridSpec(
            num_scalar_prefetch=0,
            grid=(n_steps,),
            in_specs=[
                pl.BlockSpec((TB, K), lambda i: (i, 0)),     # batch-tiled activations
                pl.BlockSpec((K, Hp), lambda i: (0, 0)),     # resident W1
                pl.BlockSpec((1, Hp), lambda i: (0, 0)),     # resident b1
                pl.BlockSpec((Hp, Op), lambda i: (0, 0)),    # resident W2
                pl.BlockSpec((1, Op), lambda i: (0, 0)),     # resident b2
            ],
            out_specs=pl.BlockSpec((TB, Op), lambda i: (i, 0)),
        ),
        compiler_params=pltpu.CompilerParams(
            dimension_semantics=("parallel",),   # shard batch tiles across TCs (v7x)
            vmem_limit_bytes=vmem_limit),
        cost_estimate=pl.CostEstimate(
            flops=flops, transcendentals=B * Hp,
            bytes_accessed=bytes_accessed),
    )(x, w1_p, b1_p, w2_p, b2_p)

    # Only the feature padding needs slicing; batch is handled by the ragged grid.
    return out_p[:, :O] if Op != O else out_p


def network_forward(x, w1, b1, w2, b2, *, mxu_dtype=jnp.bfloat16, batch_tile=512,
                    out_dtype=None):
    """Convenience one-shot API.  For repeated calls, cache prepare_params()."""
    params = prepare_params(w1, b1, w2, b2, mxu_dtype=mxu_dtype)
    return network_forward_prepared(x, params, batch_tile=batch_tile,
                                    out_dtype=out_dtype)


def init_params(key, num_inputs, num_hidden, num_outputs, gain=5.0 / 3.0):
    """Deterministic init matching Layer.__init__: randn * gain/sqrt(in), zero bias."""
    k1, k2 = jax.random.split(key)
    w1 = jax.random.normal(k1, (num_inputs, num_hidden), jnp.float32) * (
        gain / math.sqrt(num_inputs))
    b1 = jnp.zeros((num_hidden,), jnp.float32)
    w2 = jax.random.normal(k2, (num_hidden, num_outputs), jnp.float32) * (
        gain / math.sqrt(num_hidden))
    b2 = jnp.zeros((num_outputs,), jnp.float32)
    return w1, b1, w2, b2


if __name__ == "__main__":
    # NOTE: at these demo sizes (K=16 << MXU depth) the kernel is launch-
    # overhead bound; the design targets larger B/H/O.
    num_inputs, num_hidden, num_outputs = 16, 32, 8
    batch = 8

    key = jax.random.PRNGKey(0)
    kx, kp = jax.random.split(key)
    x = jax.random.normal(kx, (batch, num_inputs), jnp.float32)
    w1, b1, w2, b2 = init_params(kp, num_inputs, num_hidden, num_outputs)

    # Reference in plain JAX (same math as the PyTorch module).
    ref = jnp.tanh(x @ w1 + b1) @ w2 + b2

    # f32 MXU operands - matches the reference at f32 tolerance.
    params_f32 = prepare_params(w1, b1, w2, b2, mxu_dtype=jnp.float32)
    out = jax.block_until_ready(network_forward_prepared(x, params_f32))
    assert out.shape == (batch, num_outputs)
    assert jnp.allclose(out, ref, atol=1e-5, rtol=1e-5)

    # Default bf16 MXU fast path (weights cached/cast once; f32 accumulation,
    # f32 bias+tanh epilogue) - v6e/v7x fast path, v5e-safe.
    params_bf16 = prepare_params(w1, b1, w2, b2)          # mxu_dtype=bf16 default
    out_bf16 = jax.block_until_ready(network_forward_prepared(x, params_bf16))
    assert out_bf16.shape == (batch, num_outputs)
    assert jnp.allclose(out_bf16, ref, atol=5e-2, rtol=5e-2)

    print("KERNEL_OK")
</pallas_src>

<mosaic_0001>
module attributes {stable_mosaic.version = 11 : i64} {
  func.func @mlp_kernel(%arg0: i32, %arg1: memref<8x16xf32, #tpu.memory_space<vmem>>, %arg2: memref<16x128xf32, #tpu.memory_space<vmem>>, %arg3: memref<1x128xf32, #tpu.memory_space<vmem>>, %arg4: memref<128x128xf32, #tpu.memory_space<vmem>>, %arg5: memref<1x128xf32, #tpu.memory_space<vmem>>, %arg6: memref<8x128xf32, #tpu.memory_space<vmem>>) attributes {dimension_semantics = [#tpu.dimension_semantics<parallel>], iteration_bounds = array<i64: 1>, scalar_prefetch = 0 : i64, scratch_operands = 0 : i64, tpu.core_type = #tpu.core_type<tc>, window_params = [{transform_indices = @transform_0, window_bounds = array<i64: 8, 16>}, {pipeline_mode = #tpu.pipeline_mode<synchronous>, transform_indices = @transform_1, window_bounds = array<i64: 16, 128>}, {pipeline_mode = #tpu.pipeline_mode<synchronous>, transform_indices = @transform_2, window_bounds = array<i64: 1, 128>}, {pipeline_mode = #tpu.pipeline_mode<synchronous>, transform_indices = @transform_3, window_bounds = array<i64: 128, 128>}, {pipeline_mode = #tpu.pipeline_mode<synchronous>, transform_indices = @transform_4, window_bounds = array<i64: 1, 128>}, {transform_indices = @transform_5, window_bounds = array<i64: 8, 128>}]} {
    %c0 = arith.constant 0 : index
    %c0_0 = arith.constant 0 : index
    %0 = vector.load %arg1[%c0, %c0_0] : memref<8x16xf32, #tpu.memory_space<vmem>>, vector<8x16xf32>
    %c0_1 = arith.constant 0 : index
    %c0_2 = arith.constant 0 : index
    %1 = vector.load %arg2[%c0_1, %c0_2] : memref<16x128xf32, #tpu.memory_space<vmem>>, vector<16x128xf32>
    %cst = arith.constant dense<0.000000e+00> : vector<8x128xf32>
    %2 = tpu.matmul %0, %1, %cst {dimension_numbers = #tpu.dot_dimension_numbers<[1], [0], [0], [1], [0, 0, 1, 1], [], []>} : vector<8x16xf32>, vector<16x128xf32>, vector<8x128xf32> -> vector<8x128xf32>
    %c0_3 = arith.constant 0 : index
    %c0_4 = arith.constant 0 : index
    %3 = vector.load %arg3[%c0_3, %c0_4] : memref<1x128xf32, #tpu.memory_space<vmem>>, vector<1x128xf32>
    %4 = vector.broadcast %3 : vector<1x128xf32> to vector<8x128xf32>
    %5 = arith.addf %2, %4 : vector<8x128xf32>
    %6 = math.tanh %5 : vector<8x128xf32>
    %c0_5 = arith.constant 0 : index
    %c0_6 = arith.constant 0 : index
    %7 = vector.load %arg4[%c0_5, %c0_6] : memref<128x128xf32, #tpu.memory_space<vmem>>, vector<128x128xf32>
    %cst_7 = arith.constant dense<0.000000e+00> : vector<8x128xf32>
    %8 = tpu.matmul %6, %7, %cst_7 {dimension_numbers = #tpu.dot_dimension_numbers<[1], [0], [0], [1], [0, 0, 1, 1], [], []>} : vector<8x128xf32>, vector<128x128xf32>, vector<8x128xf32> -> vector<8x128xf32>
    %c0_8 = arith.constant 0 : index
    %c0_9 = arith.constant 0 : index
    %9 = vector.load %arg5[%c0_8, %c0_9] : memref<1x128xf32, #tpu.memory_space<vmem>>, vector<1x128xf32>
    %10 = vector.broadcast %9 : vector<1x128xf32> to vector<8x128xf32>
    %11 = arith.addf %8, %10 : vector<8x128xf32>
    %c0_10 = arith.constant 0 : index
    %c0_11 = arith.constant 0 : index
    %12 = vector.load %arg6[%c0_10, %c0_11] : memref<8x128xf32, #tpu.memory_space<vmem>>, vector<8x128xf32>
    tpu.vector_store %arg6[%c0_10, %c0_11], %11 {strides = array<i32>} : memref<8x128xf32, #tpu.memory_space<vmem>>, vector<8x128xf32>,
    return
  }
  func.func @transform_0(%arg0: i32) -> (i32, i32) {
    %c0_i32 = arith.constant 0 : i32
    %c0_i32_0 = arith.constant 0 : i32
    return %arg0, %c0_i32 : i32, i32
  }
  func.func @transform_1(%arg0: i32) -> (i32, i32) {
    %c0_i32 = arith.constant 0 : i32
    %c0_i32_0 = arith.constant 0 : i32
    %c0_i32_1 = arith.constant 0 : i32
    return %c0_i32, %c0_i32_0 : i32, i32
  }
  func.func @transform_2(%arg0: i32) -> (i32, i32) {
    %c0_i32 = arith.constant 0 : i32
    %c0_i32_0 = arith.constant 0 : i32
    %c0_i32_1 = arith.constant 0 : i32
    return %c0_i32, %c0_i32_0 : i32, i32
  }
  func.func @transform_3(%arg0: i32) -> (i32, i32) {
    %c0_i32 = arith.constant 0 : i32
    %c0_i32_0 = arith.constant 0 : i32
    %c0_i32_1 = arith.constant 0 : i32
    return %c0_i32, %c0_i32_0 : i32, i32
  }
  func.func @transform_4(%arg0: i32) -> (i32, i32) {
    %c0_i32 = arith.constant 0 : i32
    %c0_i32_0 = arith.constant 0 : i32
    %c0_i32_1 = arith.constant 0 : i32
    return %c0_i32, %c0_i32_0 : i32, i32
  }
  func.func @transform_5(%arg0: i32) -> (i32, i32) {
    %c0_i32 = arith.constant 0 : i32
    %c0_i32_0 = arith.constant 0 : i32
    return %arg0, %c0_i32 : i32, i32
  }
}

</mosaic_0001>

<llo_original>
// kernel: tpu_custom_call.1
$region0: #{tpu_custom_call.1}
  #allocation0 [shape = 'u32[]', space=smem, size = 0x4, offset = 0x4, fixed_abs, tag = 'smem constant byte address 0x4 - core index']
  #allocation1 [shape = 'u32[144,128]{1,0:T(1,128)}', space=vmem, size = 0x12000, scoped, tag = 'internal scratch']
  %s0 = inlined_call_operand.hbm [shape: f32[8,16], index: 0, kind: input, shape index: {}]
  %s1 = inlined_call_operand.hbm [shape: f32[16,128], index: 1, kind: input, shape index: {}]
  %s2 = inlined_call_operand.vmem [shape: f32[1,128], index: 2, kind: input, shape index: {}]
  %s3 = inlined_call_operand.hbm [shape: f32[128,128], index: 3, kind: input, shape index: {}]
  %s4 = inlined_call_operand.vmem [shape: f32[1,128], index: 4, kind: input, shape index: {}]
  %s5 = inlined_call_operand.hbm [shape: f32[8,128], index: 5, kind: output, shape index: {}]
  %s6 = sld [smem:[#allocation0]]
  $region42: #{tpu_custom_call.1} parent=0
    _
  %s8 = ssub.s32 1, %s6
  %s9 = scalar_select 0, %s8, %s6
  $region1: #{tpu_custom_call.1} parent=0
    #allocation2 [shape = 'u8[4096]{0}', space=vmem, size = 0x1000, scoped, tag = 'input window, operand 0, single buffered']
    #allocation3 [shape = 's32[1]{0}', space=sflag, size = 0x4, scoped, tag = 'scoped memory for tpu_custom_call.1']
    #allocation4 [shape = 's32[1]{0}', space=sflag, size = 0x4, scoped, tag = 'scoped memory for tpu_custom_call.1']
    #allocation5 [shape = 'u8[8192]{0}', space=vmem, size = 0x2000, scoped, tag = 'input window, operand 1, single buffered']
    #allocation6 [shape = 's32[1]{0}', space=sflag, size = 0x4, scoped, tag = 'scoped memory for tpu_custom_call.1']
    #allocation7 [shape = 'u8[65536]{0}', space=vmem, size = 0x10000, scoped, tag = 'input window, operand 3, single buffered']
    #allocation8 [shape = 'u8[4096]{0}', space=vmem, size = 0x1000, scoped, tag = 'output window, operand 0, single buffered']
    %10 = vsyncpa [#allocation3], 0
    %11 = vsyncpa [#allocation6], 0
    %12 = vsyncpa [#allocation4], 0
    // Predicated region
    $region2: #{tpu_custom_call.1} parent=1 // pred_check
      _
    $region3: #{tpu_custom_call.1} parent=1 // pred_check_branch
      %14 = sbr.rel (0) target = $region5
    $region4: #{tpu_custom_call.1} parent=1 // pred_region
      %s16 = ssub.s32 128, 128
      %17 = vsyncadd [#allocation3], %s16
      %s19 = sshll.u32 [#allocation2], 4
      %s20 = int_to_ptr.vmem [resolvable:$true] %s19
      %22 = dma.hbm_to_vmem [thread:$0]  %s0, 128, %s20, [#allocation3]
    $region5: #{tpu_custom_call.1} parent=1 // pred_fallthru
      _
    // Predicated region
    $region6: #{tpu_custom_call.1} parent=1 // pred_check
      _
    $region7: #{tpu_custom_call.1} parent=1 // pred_check_branch
      %24 = sbr.rel (0) target = $region9
    $region8: #{tpu_custom_call.1} parent=1 // pred_region
      %s26 = ssub.s32 256, 256
      %27 = vsyncadd [#allocation6], %s26
      %s28 = sshll.u32 [#allocation5], 4
      %s29 = int_to_ptr.vmem [resolvable:$true] %s28
      %34 = dma.hbm_to_vmem [thread:$0]  %s1, 256, %s29, [#allocation6], 128, 128, 8
    $region9: #{tpu_custom_call.1} parent=1 // pred_fallthru
      _
    // Predicated region
    $region10: #{tpu_custom_call.1} parent=1 // pred_check
      _
    $region11: #{tpu_custom_call.1} parent=1 // pred_check_branch
      %36 = sbr.rel (0) target = $region13
    $region12: #{tpu_custom_call.1} parent=1 // pred_region
      _
    $region13: #{tpu_custom_call.1} parent=1 // pred_fallthru
      _
    // Predicated region
    $region14: #{tpu_custom_call.1} parent=1 // pred_check
      _
    $region15: #{tpu_custom_call.1} parent=1 // pred_check_branch
      %38 = sbr.rel (0) target = $region17
    $region16: #{tpu_custom_call.1} parent=1 // pred_region
      %s40 = ssub.s32 2048, 2048
      %41 = vsyncadd [#allocation6], %s40
      %s42 = sshll.u32 [#allocation7], 4
      %s43 = int_to_ptr.vmem [resolvable:$true] %s42
      %48 = dma.hbm_to_vmem [thread:$0]  %s3, 2048, %s43, [#allocation6], 128, 128, 8
    $region17: #{tpu_custom_call.1} parent=1 // pred_fallthru
      _
    // Predicated region
    $region18: #{tpu_custom_call.1} parent=1 // pred_check
      _
    $region19: #{tpu_custom_call.1} parent=1 // pred_check_branch
      %50 = sbr.rel (0) target = $region21
    $region20: #{tpu_custom_call.1} parent=1 // pred_region
      _
    $region21: #{tpu_custom_call.1} parent=1 // pred_fallthru
      _
    // Predicated region
    $region22: #{tpu_custom_call.1} parent=1 // pred_check
      _
    $region23: #{tpu_custom_call.1} parent=1 // pred_check_branch
      %52 = sbr.rel (0) target = $region25
    $region24: #{tpu_custom_call.1} parent=1 // pred_region
      %53 = dma.done [#allocation3], 128
    $region25: #{tpu_custom_call.1} parent=1 // pred_fallthru
      _
    // Predicated region
    $region26: #{tpu_custom_call.1} parent=1 // pred_check
      _
    $region27: #{tpu_custom_call.1} parent=1 // pred_check_branch
      %55 = sbr.rel (0) target = $region29
    $region28: #{tpu_custom_call.1} parent=1 // pred_region
      %56 = dma.done [#allocation6], 256
    $region29: #{tpu_custom_call.1} parent=1 // pred_fallthru
      _
    // Predicated region
    $region30: #{tpu_custom_call.1} parent=1 // pred_check
      _
    $region31: #{tpu_custom_call.1} parent=1 // pred_check_branch
      %58 = sbr.rel (0) target = $region33
    $region32: #{tpu_custom_call.1} parent=1 // pred_region
      %59 = dma.done [#allocation6], 2048
    $region33: #{tpu_custom_call.1} parent=1 // pred_fallthru
      _
    %v60 = vld [vmem:[#allocation2] sm:$0xff]
    %v61 = vld [vmem:[#allocation5] sm:$0xff]
    %v62 = vld [vmem:[#allocation5 + $0x8] sm:$0xff]
    %v63 = vld [vmem:[%s2] sm:$0x1]
    %v65 = vlaneseq
    %v66 = vshrl.u32 %v65, 7
    %v67 = vsub.s32 0, %v66
    %v68 = vrot.slane %v63, %v67
    %vm70 = vcmask 130048
    %v72 = vsel %vm70, %v60, 0
    %74 = vmatprep.subr.mxu0 0.0
    %75 = vmatpush1.msra.mxu0 0.0
    %76 = vmatprep.subr.mxu0 0.0
    %77 = vmatpush1.msra.mxu0 0.0
    %78 = vmatprep.subr.mxu0 0.0
    %79 = vmatpush1.msra.mxu0 0.0
    %80 = vmatprep.subr.mxu0 0.0
    %81 = vmatpush1.msra.mxu0 0.0
    %82 = vmatprep.subr.mxu0 0.0
    %83 = vmatpush1.msra.mxu0 0.0
    %84 = vmatprep.subr.mxu0 0.0
    %85 = vmatpush1.msra.mxu0 0.0
    %86 = vmatprep.subr.mxu0 0.0
    %87 = vmatpush1.msra.mxu0 0.0
    %88 = vmatprep.subr.mxu0 0.0
    %89 = vmatpush1.msra.mxu0 0.0
    %90 = vmatprep.subr.mxu0 0.0
    %91 = vmatpush1.msra.mxu0 0.0
    %92 = vmatprep.subr.mxu0 0.0
    %93 = vmatpush1.msra.mxu0 0.0
    %94 = vmatprep.subr.mxu0 0.0
    %95 = vmatpush1.msra.mxu0 0.0
    %96 = vmatprep.subr.mxu0 0.0
    %97 = vmatpush1.msra.mxu0 0.0
    %98 = vmatprep.subr.mxu0 0.0
    %99 = vmatpush1.msra.mxu0 0.0
    %100 = vmatprep.subr.mxu0 0.0
    %101 = vmatpush1.msra.mxu0 0.0
    %102 = vmatprep.subr.mxu0 0.0
    %103 = vmatpush1.msra.mxu0 %v62
    %104 = vmatprep.subr.mxu0 0.0
    %105 = vmatpush1.msra.mxu0 %v61
    %106 = vmatprep.subr.mxu0 0.0
    %107 = vmatpush2.msra.mxu0 0.0
    %108 = vmatprep.subr.mxu0 0.0
    %109 = vmatpush2.msra.mxu0 0.0
    %110 = vmatprep.subr.mxu0 0.0
    %111 = vmatpush2.msra.mxu0 0.0
    %112 = vmatprep.subr.mxu0 0.0
    %113 = vmatpush2.msra.mxu0 0.0
    %114 = vmatprep.subr.mxu0 0.0
    %115 = vmatpush2.msra.mxu0 0.0
    %116 = vmatprep.subr.mxu0 0.0
    %117 = vmatpush2.msra.mxu0 0.0
    %118 = vmatprep.subr.mxu0 0.0
    %119 = vmatpush2.msra.mxu0 0.0
    %120 = vmatprep.subr.mxu0 0.0
    %121 = vmatpush2.msra.mxu0 0.0
    %122 = vmatprep.subr.mxu0 0.0
    %123 = vmatpush2.msra.mxu0 0.0
    %124 = vmatprep.subr.mxu0 0.0
    %125 = vmatpush2.msra.mxu0 0.0
    %126 = vmatprep.subr.mxu0 0.0
    %127 = vmatpush2.msra.mxu0 0.0
    %128 = vmatprep.subr.mxu0 0.0
    %129 = vmatpush2.msra.mxu0 0.0
    %130 = vmatprep.subr.mxu0 0.0
    %131 = vmatpush2.msra.mxu0 0.0
    %132 = vmatprep.subr.mxu0 0.0
    %133 = vmatpush2.msra.mxu0 0.0
    %134 = vmatprep.subr.mxu0 0.0
    %135 = vmatpush2.msra.mxu0 0.0
    %136 = vmatprep.subr.mxu0 0.0
    %137 = vmatpush2.msra.mxu0 0.0
    %138 = vmatprep.mubr.f32.mxu0 0.0
    %139 = vmatmul.mubr.f32.gmra.mxu0 %v72
    %v140 = vpop.f32.mrf.mxu0
    %v141 = vadd.f32 %v68, %v140
    %v142 = vpop.f32.mrf.mxu0
    %143 = vdwg.mxu0
    %v144 = vtanh.pop %v141
    %v145 = vld [vmem:[#allocation7] sm:$0xff]
    %v146 = vld [vmem:[#allocation7 + $0x8] sm:$0xff]
    %v147 = vld [vmem:[#allocation7 + $0x10] sm:$0xff]
    %v148 = vld [vmem:[#allocation7 + $0x18] sm:$0xff]
    %v149 = vld [vmem:[#allocation7 + $0x20] sm:$0xff]
    %v150 = vld [vmem:[#allocation7 + $0x28] sm:$0xff]
    %v151 = vld [vmem:[#allocation7 + $0x30] sm:$0xff]
    %v152 = vld [vmem:[#allocation7 + $0x38] sm:$0xff]
    %v153 = vld [vmem:[#allocation7 + $0x40] sm:$0xff]
    %v154 = vld [vmem:[#allocation7 + $0x48] sm:$0xff]
    %v155 = vld [vmem:[#allocation7 + $0x50] sm:$0xff]
    %v156 = vld [vmem:[#allocation7 + $0x58] sm:$0xff]
    %v157 = vld [vmem:[#allocation7 + $0x60] sm:$0xff]
    %v158 = vld [vmem:[#allocation7 + $0x68] sm:$0xff]
    %v159 = vld [vmem:[#allocation7 + $0x70] sm:$0xff]
    %v160 = vld [vmem:[#allocation7 + $0x78] sm:$0xff]
    %v161 = vld [vmem:[%s4] sm:$0x1]
    %v163 = vlaneseq
    %v164 = vshrl.u32 %v163, 7
    %v165 = vsub.s32 0, %v164
    %v166 = vrot.slane %v161, %v165
    %168 = vmatprep.subr.mxu0 0.0
    %169 = vmatpush1.msra.mxu0 %v160
    %170 = vmatprep.subr.mxu0 0.0
    %171 = vmatpush1.msra.mxu0 %v159
    %172 = vmatprep.subr.mxu0 0.0
    %173 = vmatpush1.msra.mxu0 %v158
    %174 = vmatprep.subr.mxu0 0.0
    %175 = vmatpush1.msra.mxu0 %v157
    %176 = vmatprep.subr.mxu0 0.0
    %177 = vmatpush1.msra.mxu0 %v156
    %178 = vmatprep.subr.mxu0 0.0
    %179 = vmatpush1.msra.mxu0 %v155
    %180 = vmatprep.subr.mxu0 0.0
    %181 = vmatpush1.msra.mxu0 %v154
    %182 = vmatprep.subr.mxu0 0.0
    %183 = vmatpush1.msra.mxu0 %v153
    %184 = vmatprep.subr.mxu0 0.0
    %185 = vmatpush1.msra.mxu0 %v152
    %186 = vmatprep.subr.mxu0 0.0
    %187 = vmatpush1.msra.mxu0 %v151
    %188 = vmatprep.subr.mxu0 0.0
    %189 = vmatpush1.msra.mxu0 %v150
    %190 = vmatprep.subr.mxu0 0.0
    %191 = vmatpush1.msra.mxu0 %v149
    %192 = vmatprep.subr.mxu0 0.0
    %193 = vmatpush1.msra.mxu0 %v148
    %194 = vmatprep.subr.mxu0 0.0
    %195 = vmatpush1.msra.mxu0 %v147
    %196 = vmatprep.subr.mxu0 0.0
    %197 = vmatpush1.msra.mxu0 %v146
    %198 = vmatprep.subr.mxu0 0.0
    %199 = vmatpush1.msra.mxu0 %v145
    %200 = vmatprep.subr.mxu0 0.0
    %201 = vmatpush2.msra.mxu0 0.0
    %202 = vmatprep.subr.mxu0 0.0
    %203 = vmatpush2.msra.mxu0 0.0
    %204 = vmatprep.subr.mxu0 0.0
    %205 = vmatpush2.msra.mxu0 0.0
    %206 = vmatprep.subr.mxu0 0.0
    %207 = vmatpush2.msra.mxu0 0.0
    %208 = vmatprep.subr.mxu0 0.0
    %209 = vmatpush2.msra.mxu0 0.0
    %210 = vmatprep.subr.mxu0 0.0
    %211 = vmatpush2.msra.mxu0 0.0
    %212 = vmatprep.subr.mxu0 0.0
    %213 = vmatpush2.msra.mxu0 0.0
    %214 = vmatprep.subr.mxu0 0.0
    %215 = vmatpush2.msra.mxu0 0.0
    %216 = vmatprep.subr.mxu0 0.0
    %217 = vmatpush2.msra.mxu0 0.0
    %218 = vmatprep.subr.mxu0 0.0
    %219 = vmatpush2.msra.mxu0 0.0
    %220 = vmatprep.subr.mxu0 0.0
    %221 = vmatpush2.msra.mxu0 0.0
    %222 = vmatprep.subr.mxu0 0.0
    %223 = vmatpush2.msra.mxu0 0.0
    %224 = vmatprep.subr.mxu0 0.0
    %225 = vmatpush2.msra.mxu0 0.0
    %226 = vmatprep.subr.mxu0 0.0
    %227 = vmatpush2.msra.mxu0 0.0
    %228 = vmatprep.subr.mxu0 0.0
    %229 = vmatpush2.msra.mxu0 0.0
    %230 = vmatprep.subr.mxu0 0.0
    %231 = vmatpush2.msra.mxu0 0.0
    %232 = vmatprep.mubr.f32.mxu0 0.0
    %233 = vmatmul.mubr.f32.gmra.mxu0 %v144
    %v234 = vpop.f32.mrf.mxu0
    %v235 = vadd.f32 %v166, %v234
    %v236 = vpop.f32.mrf.mxu0
    %237 = vdwg.mxu0
    %238 = vst [vmem:[#allocation8] sm:$0xff] %v235
    // Predicated region
    $region34: #{tpu_custom_call.1} parent=1 // pred_check
      _
    $region35: #{tpu_custom_call.1} parent=1 // pred_check_branch
      %240 = sbr.rel (0) target = $region37
    $region36: #{tpu_custom_call.1} parent=1 // pred_region
      %s242 = ssub.s32 128, 128
      %243 = vsyncadd [#allocation4], %s242
      %s245 = sshll.u32 [#allocation8], 4
      %s246 = int_to_ptr.vmem [resolvable:$true] %s245
      %248 = dma.vmem_to_hbm [thread:$0]  %s246, 128, %s5, [#allocation4]
    $region37: #{tpu_custom_call.1} parent=1 // pred_fallthru
      _
    // Predicated region
    $region38: #{tpu_custom_call.1} parent=1 // pred_check
      _
    $region39: #{tpu_custom_call.1} parent=1 // pred_check_branch
      %250 = sbr.rel (0) target = $region41
    $region40: #{tpu_custom_call.1} parent=1 // pred_region
      %251 = dma.done [#allocation4], 128
    $region41: #{tpu_custom_call.1} parent=1 // pred_fallthru
      _
    %252 = vsyncpa [#allocation3], 1
    %253 = vsyncpa [#allocation6], 1
    %254 = vsyncpa [#allocation4], 1

</llo_original>
